<compile_context>
chip_gen: v7x
topology: tpu7x:2x2x1
jax: 0.10.0
libtpu: 0.0.40
codegen_flags: <defaults>
</compile_context>

<pallas_src>
import jax
import jax.numpy as jnp
from jax.experimental import pallas as pl
from jax.experimental.pallas import tpu as pltpu

_LANES = 1024                              # lane-dense width (multiple of 128)
_TARGET_BLOCK_BYTES = 8 * 1024 * 1024      # ~8 MiB per block (perf review)
_VMEM_SLACK_BYTES = 8 * 1024 * 1024        # headroom on top of 4*block
_MIN_VMEM_LIMIT_BYTES = 16 * 1024 * 1024
_MAX_VMEM_LIMIT_BYTES = 48 * 1024 * 1024   # keep below v7x's 64 MiB physical


def _scale_kernel(scale_ref, x_ref, o_ref):
    # scale_ref: (1, 1) f32 scalar in SMEM.  Compute in f32, cast at store.
    s = scale_ref[0, 0]
    o_ref[...] = (x_ref[...].astype(jnp.float32) * s).astype(o_ref.dtype)


def _choose_tiling(total_elems, itemsize):
    """Pick (lanes, block_rows, rows) for a lane-dense 2D layout.

    block_rows is either a multiple of the dtype's sublane tile or equal to
    the full row extent (both legal per the (8,128) BlockSpec rule).
    """
    lanes = _LANES
    rows = -(-total_elems // lanes)                         # cdiv
    sublane = max(8, 32 // itemsize)                        # 8 f32 / 16 bf16 / 32 i8
    budget_rows = _TARGET_BLOCK_BYTES // (lanes * itemsize)
    budget_rows = max(sublane, (budget_rows // sublane) * sublane)
    if budget_rows >= rows:
        if rows >= 2 * sublane:
            # Split into (at least) two blocks so both v7x TensorCores can
            # stream via the "parallel" grid axis.
            half = -(-rows // 2)
            block_rows = -(-half // sublane) * sublane
        else:
            block_rows = rows                               # full extent -> legal
    else:
        block_rows = budget_rows                            # sublane multiple -> legal
    return lanes, block_rows, rows


def scale_forward(x, scale, *, donate_input=False):
    """x: arbitrary-shaped array (e.g. NCHW). scale: () or (1,) scalar param.

    Note: with donate_input=True on the (rare) padded path, the alias applies
    to the padded intermediate rather than the original x.
    """
    orig_shape = x.shape
    total = x.size
    itemsize = jnp.dtype(x.dtype).itemsize

    lanes, block_rows, rows = _choose_tiling(total, itemsize)
    padded_total = rows * lanes

    x_flat = x.reshape(-1)
    if padded_total != total:
        # Only hit when total is not a multiple of 1024 lanes; pad < 1024 elems.
        x_flat = jnp.pad(x_flat, (0, padded_total - total))
    x2d = x_flat.reshape(rows, lanes)

    # Keep scale in f32 (SMEM scalars are 32-bit); cast only the product.
    scale_smem = jnp.asarray(scale, dtype=jnp.float32).reshape(1, 1)

    grid = (pl.cdiv(rows, block_rows),)      # ragged last block handled by Pallas
    block_bytes = block_rows * lanes * itemsize
    vmem_limit = min(
        _MAX_VMEM_LIMIT_BYTES,
        max(_MIN_VMEM_LIMIT_BYTES, 4 * block_bytes + _VMEM_SLACK_BYTES),
    )

    out2d = pl.pallas_call(
        _scale_kernel,
        out_shape=jax.ShapeDtypeStruct((rows, lanes), x.dtype),
        grid_spec=pltpu.PrefetchScalarGridSpec(
            num_scalar_prefetch=0,
            grid=grid,
            in_specs=[
                pl.BlockSpec(memory_space=pltpu.SMEM),                    # scalar
                pl.BlockSpec((block_rows, lanes), lambda i: (i, 0)),      # x tile
            ],
            out_specs=pl.BlockSpec((block_rows, lanes), lambda i: (i, 0)),
        ),
        compiler_params=pltpu.CompilerParams(
            dimension_semantics=("parallel",),
            vmem_limit_bytes=vmem_limit,
        ),
        cost_estimate=pl.CostEstimate(
            flops=total,
            transcendentals=0,
            bytes_accessed=2 * padded_total * itemsize,
        ),
        # Optional HBM-footprint saver when the caller no longer needs x.
        input_output_aliases=({1: 0} if donate_input else {}),
    )(scale_smem, x2d)

    out_flat = out2d.reshape(-1)
    if padded_total != total:
        out_flat = out_flat[:total]
    return out_flat.reshape(orig_shape)


if __name__ == "__main__":
    key = jax.random.PRNGKey(0)

    # Deterministic parameter init matching Scale(init_value=0.001)
    scale_param = jnp.array([0.001], dtype=jnp.float32)

    # Primary test: small NCHW input consistent with the module.
    x = jax.random.normal(key, (2, 4, 16, 16), dtype=jnp.float32)
    out = jax.block_until_ready(scale_forward(x, scale_param))
    ref = x * scale_param[0]
    assert out.shape == x.shape and out.dtype == x.dtype
    assert jnp.allclose(out, ref, rtol=1e-6, atol=1e-6)

    # Padding path: element count not a multiple of 1024 lanes.
    x_odd = jax.random.normal(jax.random.PRNGKey(1), (1, 3, 7, 5),
                              dtype=jnp.float32)
    out_odd = jax.block_until_ready(scale_forward(x_odd, scale_param))
    assert jnp.allclose(out_odd, x_odd * scale_param[0], rtol=1e-6, atol=1e-6)

    # bf16 path: exercises dtype-aware sublane rounding; f32 compute then
    # downcast to x.dtype (documented difference vs PyTorch promotion).
    x_bf16 = jax.random.normal(jax.random.PRNGKey(2), (2, 4, 16, 16),
                               dtype=jnp.bfloat16)
    out_bf16 = jax.block_until_ready(scale_forward(x_bf16, scale_param))
    ref_bf16 = (x_bf16.astype(jnp.float32) * 0.001).astype(jnp.bfloat16)
    assert out_bf16.dtype == jnp.bfloat16
    assert jnp.allclose(out_bf16.astype(jnp.float32),
                        ref_bf16.astype(jnp.float32), rtol=1e-2, atol=1e-4)

    print("KERNEL_OK")
</pallas_src>

<mosaic_0001>
module attributes {stable_mosaic.version = 11 : i64} {
  func.func @_scale_kernel(%arg0: i32, %arg1: memref<1x1xf32, #tpu.memory_space<smem>>, %arg2: memref<2x1024xf32, #tpu.memory_space<vmem>>, %arg3: memref<2x1024xf32, #tpu.memory_space<vmem>>) attributes {dimension_semantics = [#tpu.dimension_semantics<parallel>], iteration_bounds = array<i64: 1>, scalar_prefetch = 0 : i64, scratch_operands = 0 : i64, tpu.core_type = #tpu.core_type<tc>, window_params = [{transform_indices = @transform_0, window_bounds = array<i64: 1, 1>}, {transform_indices = @transform_1, window_bounds = array<i64: 2, 1024>}, {transform_indices = @transform_2, window_bounds = array<i64: 2, 1024>}]} {
    %c0 = arith.constant 0 : index
    %c0_0 = arith.constant 0 : index
    %0 = memref.load %arg1[%c0, %c0_0] : memref<1x1xf32, #tpu.memory_space<smem>>
    %c0_1 = arith.constant 0 : index
    %c0_2 = arith.constant 0 : index
    %1 = vector.load %arg2[%c0_1, %c0_2] : memref<2x1024xf32, #tpu.memory_space<vmem>>, vector<2x1024xf32>
    %2 = vector.broadcast %0 : f32 to vector<2x1024xf32>
    %3 = arith.mulf %1, %2 : vector<2x1024xf32>
    %c0_3 = arith.constant 0 : index
    %c0_4 = arith.constant 0 : index
    %4 = vector.load %arg3[%c0_3, %c0_4] : memref<2x1024xf32, #tpu.memory_space<vmem>>, vector<2x1024xf32>
    tpu.vector_store %arg3[%c0_3, %c0_4], %3 {strides = array<i32>} : memref<2x1024xf32, #tpu.memory_space<vmem>>, vector<2x1024xf32>,
    return
  }
  func.func @transform_0(%arg0: i32) -> (i32, i32) {
    %c0_i32 = arith.constant 0 : i32
    %c0_i32_0 = arith.constant 0 : i32
    %c0_i32_1 = arith.constant 0 : i32
    return %c0_i32, %c0_i32_0 : i32, i32
  }
  func.func @transform_1(%arg0: i32) -> (i32, i32) {
    %c0_i32 = arith.constant 0 : i32
    %c0_i32_0 = arith.constant 0 : i32
    return %arg0, %c0_i32 : i32, i32
  }
  func.func @transform_2(%arg0: i32) -> (i32, i32) {
    %c0_i32 = arith.constant 0 : i32
    %c0_i32_0 = arith.constant 0 : i32
    return %arg0, %c0_i32 : i32, i32
  }
}

</mosaic_0001>

<llo_original>
// kernel: tpu_custom_call.1
$region0: #{tpu_custom_call.1}
  #allocation0 [shape = 'u32[]', space=smem, size = 0x4, offset = 0x4, fixed_abs, tag = 'smem constant byte address 0x4 - core index']
  #allocation1 [shape = 'u32[144,128]{1,0:T(1,128)}', space=vmem, size = 0x12000, scoped, tag = 'internal scratch']
  #allocation2 [shape = 'f32[1,1]{1,0:T(1,128)S(6)}', space=smem, size = 0x200, scoped, tag = 'scoped memory for tpu_custom_call.1']
  %s0 = inlined_call_operand.<no memory space> [shape: f32[1,1], index: 0, kind: input, shape index: {}]
  %s1 = inlined_call_operand.hbm [shape: f32[2,1024], index: 1, kind: input, shape index: {}]
  %s2 = inlined_call_operand.hbm [shape: f32[2,1024], index: 2, kind: output, shape index: {}]
  %s3 = sld [smem:[#allocation0]]
  $region22: #{tpu_custom_call.1} parent=0
    _
  %s5 = ssub.s32 1, %s3
  %s6 = scalar_select 0, %s5, %s3
  %7 = sst [smem:[#allocation2]] %s0
  $region1: #{tpu_custom_call.1} parent=0
    #allocation3 [shape = 'u8[8192]{0}', space=vmem, size = 0x2000, scoped, tag = 'input window, operand 1, single buffered']
    #allocation4 [shape = 's32[1]{0}', space=sflag, size = 0x4, scoped, tag = 'scoped memory for tpu_custom_call.1']
    #allocation5 [shape = 's32[1]{0}', space=sflag, size = 0x4, scoped, tag = 'scoped memory for tpu_custom_call.1']
    #allocation6 [shape = 'u8[8192]{0}', space=vmem, size = 0x2000, scoped, tag = 'output window, operand 0, single buffered']
    %8 = vsyncpa [#allocation4], 0
    %9 = vsyncpa [#allocation5], 0
    // Predicated region
    $region2: #{tpu_custom_call.1} parent=1 // pred_check
      _
    $region3: #{tpu_custom_call.1} parent=1 // pred_check_branch
      %11 = sbr.rel (0) target = $region5
    $region4: #{tpu_custom_call.1} parent=1 // pred_region
      _
    $region5: #{tpu_custom_call.1} parent=1 // pred_fallthru
      _
    // Predicated region
    $region6: #{tpu_custom_call.1} parent=1 // pred_check
      _
    $region7: #{tpu_custom_call.1} parent=1 // pred_check_branch
      %13 = sbr.rel (0) target = $region9
    $region8: #{tpu_custom_call.1} parent=1 // pred_region
      %s15 = ssub.s32 256, 256
      %16 = vsyncadd [#allocation4], %s15
      %s18 = sshll.u32 [#allocation3], 4
      %s19 = int_to_ptr.vmem [resolvable:$true] %s18
      %21 = dma.hbm_to_vmem [thread:$0]  %s1, 256, %s19, [#allocation4]
    $region9: #{tpu_custom_call.1} parent=1 // pred_fallthru
      _
    // Predicated region
    $region10: #{tpu_custom_call.1} parent=1 // pred_check
      _
    $region11: #{tpu_custom_call.1} parent=1 // pred_check_branch
      %23 = sbr.rel (0) target = $region13
    $region12: #{tpu_custom_call.1} parent=1 // pred_region
      %24 = dma.done [#allocation4], 256
    $region13: #{tpu_custom_call.1} parent=1 // pred_fallthru
      _
    %s25 = sld [smem:[#allocation2]]
    %v26 = vld [vmem:[#allocation3] sm:$0xff]
    %v27 = vld [vmem:[#allocation3 + $0x8] sm:$0xff]
    %v28 = vstv %s25
    %v29 = vmul.f32 %v26, %v28
    %v30 = vmul.f32 %v27, %v28
    %31 = vst [vmem:[#allocation6] sm:$0xff] %v29
    %32 = vst [vmem:[#allocation6 + $0x8] sm:$0xff] %v30
    // Predicated region
    $region14: #{tpu_custom_call.1} parent=1 // pred_check
      _
    $region15: #{tpu_custom_call.1} parent=1 // pred_check_branch
      %34 = sbr.rel (0) target = $region17
    $region16: #{tpu_custom_call.1} parent=1 // pred_region
      %s36 = ssub.s32 256, 256
      %37 = vsyncadd [#allocation5], %s36
      %s39 = sshll.u32 [#allocation6], 4
      %s40 = int_to_ptr.vmem [resolvable:$true] %s39
      %42 = dma.vmem_to_hbm [thread:$0]  %s40, 256, %s2, [#allocation5]
    $region17: #{tpu_custom_call.1} parent=1 // pred_fallthru
      _
    // Predicated region
    $region18: #{tpu_custom_call.1} parent=1 // pred_check
      _
    $region19: #{tpu_custom_call.1} parent=1 // pred_check_branch
      %44 = sbr.rel (0) target = $region21
    $region20: #{tpu_custom_call.1} parent=1 // pred_region
      %45 = dma.done [#allocation5], 256
    $region21: #{tpu_custom_call.1} parent=1 // pred_fallthru
      _
    %46 = vsyncpa [#allocation4], 1
    %47 = vsyncpa [#allocation5], 1

</llo_original>
